<compile_context>
chip_gen: v5e
topology: v5e:2x2
jax: 0.10.0
libtpu: 0.0.40
codegen_flags: <defaults>
</compile_context>

<pallas_src>
import jax
import jax.numpy as jnp
from jax import lax
from jax.experimental import pallas as pl
from jax.experimental.pallas import tpu as pltpu


# ----------------------------------------------------------------------------
# Fused LayerNorm + lm_head kernel
#   input  : pre-LayerNorm hidden tile  (tm, E)  f32
#            ln gamma / beta            (1, E)   f32
#            wte vocab tile             (tv, E)  bf16
#   output : logits tile                (tm, tv) f32
#   logits = LN(pre_h) @ wte.T  done as dot_general contracting last dims
#   (no in-kernel transpose).
# ----------------------------------------------------------------------------
def _lm_head_ln_kernel(h_ref, g_ref, b_ref, w_ref, o_ref):
    x = h_ref[...]                                          # (tm, E) f32
    mu = jnp.mean(x, axis=-1, keepdims=True)
    xc = x - mu
    var = jnp.mean(xc * xc, axis=-1, keepdims=True)
    xn = xc * lax.rsqrt(var + 1e-5)
    xn = xn * g_ref[...] + b_ref[...]                       # LayerNorm affine
    h_bf16 = xn.astype(jnp.bfloat16)
    o_ref[...] = lax.dot_general(
        h_bf16, w_ref[...],
        dimension_numbers=(((1,), (1,)), ((), ())),         # contract E with E
        preferred_element_type=jnp.float32,
    ).astype(o_ref.dtype)


def lm_head_fused(pre_h, ln_g, ln_b, wte_bf16, *, tm=256, tv=512,
                  out_dtype=jnp.float32):
    """logits = LayerNorm(pre_h) @ wte.T, tiled (tm x tv) over (M, V)."""
    M, E = pre_h.shape
    V, _ = wte_bf16.shape
    tm = min(tm, M)
    tv = min(tv, V)
    grid = (pl.cdiv(M, tm), pl.cdiv(V, tv))

    cost = pl.CostEstimate(
        flops=2 * M * V * E,
        transcendentals=M * grid[1],                        # rsqrt per row per V-tile
        bytes_accessed=4 * M * E + 2 * V * E + 4 * M * V,
    )

    return pl.pallas_call(
        _lm_head_ln_kernel,
        out_shape=jax.ShapeDtypeStruct((M, V), out_dtype),
        grid_spec=pltpu.PrefetchScalarGridSpec(
            num_scalar_prefetch=0,
            grid=grid,
            in_specs=[
                pl.BlockSpec((tm, E), lambda i, j: (i, 0)),     # hidden rows
                pl.BlockSpec((1, E), lambda i, j: (0, 0)),      # ln gamma
                pl.BlockSpec((1, E), lambda i, j: (0, 0)),      # ln beta
                pl.BlockSpec((tv, E), lambda i, j: (j, 0)),     # wte vocab tile
            ],
            out_specs=pl.BlockSpec((tm, tv), lambda i, j: (i, j)),
        ),
        compiler_params=pltpu.CompilerParams(
            dimension_semantics=("parallel", "parallel"),       # megacore on v7x
            vmem_limit_bytes=64 * 1024 * 1024,
        ),
        cost_estimate=cost,
    )(pre_h, ln_g.reshape(1, E), ln_b.reshape(1, E), wte_bf16)


# ----------------------------------------------------------------------------
# Latent injection (tiny: [B, 2Z] x [E, 2Z]) — single fused XLA dot_general;
# a standalone pallas_call costs more in launch/DMA than the math.
#   extra = latent_sample @ W_var.T + logvar @ W_LS.T        [B, E]
# ----------------------------------------------------------------------------
def latent_inject(latent_sample, logvar, w_var, w_ls):
    lat = jnp.concatenate([latent_sample, logvar], axis=-1)       # [B, 2Z]
    w = jnp.concatenate([w_var, w_ls], axis=-1)                   # [E, 2Z]
    return lax.dot_general(
        lat, w, dimension_numbers=(((1,), (1,)), ((), ())),
        preferred_element_type=jnp.float32,
    )                                                             # [B, E]


# ----------------------------------------------------------------------------
# Synthetic "core_module" + full decoder forward
# ----------------------------------------------------------------------------
def decoder_forward(params, input_ids, type_ids, latent_sample=None, logvar=None):
    """UACVAEMlpDecoder.forward with inject_type == 'embedding'."""
    B, S = input_ids.shape
    E = params["wte"].shape[1]

    extra = None
    if latent_sample is not None:
        # extra_embedding = (latent_head_var(latent_sample)
        #                    + latent_head_LS(logvar)).unsqueeze(1)   [B, 1, E]
        extra = latent_inject(
            latent_sample, logvar,
            params["latent_head_var"], params["latent_head_LS"],
        )[:, None, :]

    # --- synthetic core_module (see TODO above): embedding sum; its final
    #     LayerNorm is fused into the lm_head Pallas kernel. ---
    tok = jnp.take(params["wte"], input_ids, axis=0)          # [B, S, E]
    typ = jnp.take(params["tte"], type_ids, axis=0)           # [B, S, E]
    pos = params["wpe"][None, :S, :]                          # [1, S, E]
    pre_h = tok + typ + pos
    if extra is not None:
        pre_h = pre_h + extra                                 # [B, S, E]

    # lm_head (weight tied to wte) fused with the core's final LayerNorm.
    wte_bf16 = params["wte"].astype(jnp.bfloat16)             # bf16 MXU operand
    logits_flat = lm_head_fused(
        pre_h.reshape(B * S, E), params["ln_g"], params["ln_b"], wte_bf16
    )
    return logits_flat.reshape(B, S, -1)


# ----------------------------------------------------------------------------
# Parameter construction (deterministic, in-script)
# ----------------------------------------------------------------------------
def make_params(key, *, vocab, embed_dim, z_dim, max_pos, n_types=2):
    ks = jax.random.split(key, 5)
    scale = 0.02
    return {
        "wte": scale * jax.random.normal(ks[0], (vocab, embed_dim), jnp.float32),
        "tte": scale * jax.random.normal(ks[1], (n_types, embed_dim), jnp.float32),
        "wpe": scale * jax.random.normal(ks[2], (max_pos, embed_dim), jnp.float32),
        "latent_head_var": scale
        * jax.random.normal(ks[3], (embed_dim, z_dim), jnp.float32),
        "latent_head_LS": scale
        * jax.random.normal(ks[4], (embed_dim, z_dim), jnp.float32),
        "ln_g": jnp.ones((embed_dim,), jnp.float32),
        "ln_b": jnp.zeros((embed_dim,), jnp.float32),
    }


if __name__ == "__main__":
    B, S = 2, 8
    Z, E, V = 16, 32, 256
    PAD_ID = 0

    key = jax.random.PRNGKey(0)
    kp, ki, kt, kl, kv = jax.random.split(key, 5)

    params = make_params(kp, vocab=V, embed_dim=E, z_dim=Z, max_pos=S)

    input_ids = jax.random.randint(ki, (B, S), 0, V, dtype=jnp.int32)
    type_ids = jax.random.randint(kt, (B, S), 0, 2, dtype=jnp.int32)
    latent_sample = jax.random.normal(kl, (B, Z), jnp.float32)
    logvar = jax.random.normal(kv, (B, Z), jnp.float32)

    logits = decoder_forward(params, input_ids, type_ids, latent_sample, logvar)
    logits = jax.block_until_ready(logits)

    assert logits.shape == (B, S, V), logits.shape
    assert logits.dtype == jnp.float32

    print("KERNEL_OK")
</pallas_src>

<mosaic_0001>
module attributes {stable_mosaic.version = 11 : i64} {
  func.func @_lm_head_ln_kernel(%arg0: i32, %arg1: i32, %arg2: memref<16x32xf32, #tpu.memory_space<vmem>>, %arg3: memref<1x32xf32, #tpu.memory_space<vmem>>, %arg4: memref<1x32xf32, #tpu.memory_space<vmem>>, %arg5: memref<256x32xbf16, #tpu.memory_space<vmem>>, %arg6: memref<16x256xf32, #tpu.memory_space<vmem>>) attributes {dimension_semantics = [#tpu.dimension_semantics<parallel>, #tpu.dimension_semantics<parallel>], iteration_bounds = array<i64: 1, 1>, scalar_prefetch = 0 : i64, scratch_operands = 0 : i64, tpu.core_type = #tpu.core_type<tc>, window_params = [{transform_indices = @transform_0, window_bounds = array<i64: 16, 32>}, {pipeline_mode = #tpu.pipeline_mode<synchronous>, transform_indices = @transform_1, window_bounds = array<i64: 1, 32>}, {pipeline_mode = #tpu.pipeline_mode<synchronous>, transform_indices = @transform_2, window_bounds = array<i64: 1, 32>}, {transform_indices = @transform_3, window_bounds = array<i64: 256, 32>}, {transform_indices = @transform_4, window_bounds = array<i64: 16, 256>}]} {
    %c0 = arith.constant 0 : index
    %c0_0 = arith.constant 0 : index
    %0 = vector.load %arg2[%c0, %c0_0] : memref<16x32xf32, #tpu.memory_space<vmem>>, vector<16x32xf32>
    %cst = arith.constant dense<0.000000e+00> : vector<16xf32>
    %1 = vector.multi_reduction <add>, %0, %cst [1] : vector<16x32xf32> to vector<16xf32>
    %2 = vector.shape_cast %1 : vector<16xf32> to vector<16x1xf32>
    %cst_1 = arith.constant 3.200000e+01 : f32
    %3 = vector.broadcast %cst_1 : f32 to vector<16x1xf32>
    %4 = arith.divf %2, %3 : vector<16x1xf32>
    %5 = vector.broadcast %4 : vector<16x1xf32> to vector<16x32xf32>
    %6 = arith.subf %0, %5 : vector<16x32xf32>
    %7 = arith.mulf %6, %6 : vector<16x32xf32>
    %cst_2 = arith.constant dense<0.000000e+00> : vector<16xf32>
    %8 = vector.multi_reduction <add>, %7, %cst_2 [1] : vector<16x32xf32> to vector<16xf32>
    %9 = vector.shape_cast %8 : vector<16xf32> to vector<16x1xf32>
    %cst_3 = arith.constant 3.200000e+01 : f32
    %10 = vector.broadcast %cst_3 : f32 to vector<16x1xf32>
    %11 = arith.divf %9, %10 : vector<16x1xf32>
    %cst_4 = arith.constant 9.99999974E-6 : f32
    %12 = vector.broadcast %cst_4 : f32 to vector<16x1xf32>
    %13 = arith.addf %11, %12 : vector<16x1xf32>
    %14 = math.rsqrt %13 : vector<16x1xf32>
    %15 = vector.broadcast %14 : vector<16x1xf32> to vector<16x32xf32>
    %16 = arith.mulf %6, %15 : vector<16x32xf32>
    %c0_5 = arith.constant 0 : index
    %c0_6 = arith.constant 0 : index
    %17 = vector.load %arg3[%c0_5, %c0_6] : memref<1x32xf32, #tpu.memory_space<vmem>>, vector<1x32xf32>
    %18 = vector.broadcast %17 : vector<1x32xf32> to vector<16x32xf32>
    %19 = arith.mulf %16, %18 : vector<16x32xf32>
    %c0_7 = arith.constant 0 : index
    %c0_8 = arith.constant 0 : index
    %20 = vector.load %arg4[%c0_7, %c0_8] : memref<1x32xf32, #tpu.memory_space<vmem>>, vector<1x32xf32>
    %21 = vector.broadcast %20 : vector<1x32xf32> to vector<16x32xf32>
    %22 = arith.addf %19, %21 : vector<16x32xf32>
    %23 = arith.truncf %22 : vector<16x32xf32> to vector<16x32xbf16>
    %c0_9 = arith.constant 0 : index
    %c0_10 = arith.constant 0 : index
    %24 = vector.load %arg5[%c0_9, %c0_10] : memref<256x32xbf16, #tpu.memory_space<vmem>>, vector<256x32xbf16>
    %cst_11 = arith.constant dense<0.000000e+00> : vector<16x256xf32>
    %25 = tpu.matmul %23, %24, %cst_11 {dimension_numbers = #tpu.dot_dimension_numbers<[1], [1], [0], [0], [0, 0, 1, 0], [], []>} : vector<16x32xbf16>, vector<256x32xbf16>, vector<16x256xf32> -> vector<16x256xf32>
    %c0_12 = arith.constant 0 : index
    %c0_13 = arith.constant 0 : index
    %26 = vector.load %arg6[%c0_12, %c0_13] : memref<16x256xf32, #tpu.memory_space<vmem>>, vector<16x256xf32>
    tpu.vector_store %arg6[%c0_12, %c0_13], %25 {strides = array<i32>} : memref<16x256xf32, #tpu.memory_space<vmem>>, vector<16x256xf32>,
    return
  }
  func.func @transform_0(%arg0: i32, %arg1: i32) -> (i32, i32) {
    %c0_i32 = arith.constant 0 : i32
    %c0_i32_0 = arith.constant 0 : i32
    return %arg0, %c0_i32 : i32, i32
  }
  func.func @transform_1(%arg0: i32, %arg1: i32) -> (i32, i32) {
    %c0_i32 = arith.constant 0 : i32
    %c0_i32_0 = arith.constant 0 : i32
    %c0_i32_1 = arith.constant 0 : i32
    return %c0_i32, %c0_i32_0 : i32, i32
  }
  func.func @transform_2(%arg0: i32, %arg1: i32) -> (i32, i32) {
    %c0_i32 = arith.constant 0 : i32
    %c0_i32_0 = arith.constant 0 : i32
    %c0_i32_1 = arith.constant 0 : i32
    return %c0_i32, %c0_i32_0 : i32, i32
  }
  func.func @transform_3(%arg0: i32, %arg1: i32) -> (i32, i32) {
    %c0_i32 = arith.constant 0 : i32
    %c0_i32_0 = arith.constant 0 : i32
    return %arg1, %c0_i32 : i32, i32
  }
  func.func @transform_4(%arg0: i32, %arg1: i32) -> (i32, i32) {
    %c0_i32 = arith.constant 0 : i32
    return %arg0, %arg1 : i32, i32
  }
}

</mosaic_0001>

<llo_original>
// kernel: tpu_custom_call.1
$region0: #{tpu_custom_call.1}
  #allocation0 [shape = 'u32[]', space=smem, size = 0x4, offset = 0x4, fixed_abs, tag = 'smem constant byte address 0x4 - core index']
  #allocation1 [shape = 'u32[72,128]{1,0:T(1,128)}', space=vmem, size = 0x9000, scoped, tag = 'internal scratch']
  %s0 = inlined_call_operand.vmem [shape: f32[16,32], index: 0, kind: input, shape index: {}]
  %s1 = inlined_call_operand.vmem [shape: f32[1,32], index: 1, kind: input, shape index: {}]
  %s2 = inlined_call_operand.vmem [shape: f32[1,32], index: 2, kind: input, shape index: {}]
  %s3 = inlined_call_operand.vmem [shape: bf16[256,32], index: 3, kind: input, shape index: {}]
  %s4 = inlined_call_operand.hbm [shape: f32[16,256], index: 4, kind: output, shape index: {}]
  %s5 = sld [smem:[#allocation0]]
  $region26: #{tpu_custom_call.1} parent=0
    _
  %s7 = ssub.s32 1, %s5
  %s8 = scalar_select 0, %s7, %s5
  $region1: #{tpu_custom_call.1} parent=0
    #allocation2 [shape = 'u8[16384]{0}', space=vmem, size = 0x4000, scoped, tag = 'output window, operand 0, single buffered']
    #allocation3 [shape = 's32[1]{0}', space=sflag, size = 0x4, scoped, tag = 'scoped memory for tpu_custom_call.1']
    %9 = vsyncpa [#allocation3], 0
    // Predicated region
    $region2: #{tpu_custom_call.1} parent=1 // pred_check
      _
    $region3: #{tpu_custom_call.1} parent=1 // pred_check_branch
      %11 = sbr.rel (0) target = $region5
    $region4: #{tpu_custom_call.1} parent=1 // pred_region
      _
    $region5: #{tpu_custom_call.1} parent=1 // pred_fallthru
      _
    // Predicated region
    $region6: #{tpu_custom_call.1} parent=1 // pred_check
      _
    $region7: #{tpu_custom_call.1} parent=1 // pred_check_branch
      %13 = sbr.rel (0) target = $region9
    $region8: #{tpu_custom_call.1} parent=1 // pred_region
      _
    $region9: #{tpu_custom_call.1} parent=1 // pred_fallthru
      _
    // Predicated region
    $region10: #{tpu_custom_call.1} parent=1 // pred_check
      _
    $region11: #{tpu_custom_call.1} parent=1 // pred_check_branch
      %15 = sbr.rel (0) target = $region13
    $region12: #{tpu_custom_call.1} parent=1 // pred_region
      _
    $region13: #{tpu_custom_call.1} parent=1 // pred_fallthru
      _
    // Predicated region
    $region14: #{tpu_custom_call.1} parent=1 // pred_check
      _
    $region15: #{tpu_custom_call.1} parent=1 // pred_check_branch
      %17 = sbr.rel (0) target = $region17
    $region16: #{tpu_custom_call.1} parent=1 // pred_region
      _
    $region17: #{tpu_custom_call.1} parent=1 // pred_fallthru
      _
    %v18 = vld [vmem:[%s0] sm:$0xff]
    %v19 = vld [vmem:[%s0 + $0x8] sm:$0xff]
    %vm20 = vcmask 261120
    %v21 = vsel %vm20, %v18, 0.0
    %22 = vadd.xlane.f32.xlu0 %v21
    %v23 = vpop.xlane.xlu0 %22
    %v24 = vsel %vm20, %v19, 0.0
    %25 = vadd.xlane.f32.xlu0 %v24
    %v26 = vpop.xlane.xlu0 %25
    %v27 = vrcp.pop 32.0
    %v28 = vmul.f32 32.0, %v27
    %v29 = vsub.f32 1.0, %v28
    %v30 = vmul.f32 %v27, %v29
    %v31 = vadd.f32 %v27, %v30
    %vm32 = vweird.f32 %v27
    %v33 = vsel %vm32, %v27, %v31
    %v34 = vmul.f32 %v23, %v33
    %v35 = vmul.f32 %v26, %v33
    %v36 = vsub.f32 %v18, %v34
    %v37 = vsub.f32 %v19, %v35
    %v38 = vmul.f32 %v36, %v36
    %v39 = vmul.f32 %v37, %v37
    %v40 = vsel %vm20, %v38, 0.0
    %41 = vadd.xlane.f32.xlu0 %v40
    %v42 = vpop.xlane.xlu0 %41
    %v43 = vsel %vm20, %v39, 0.0
    %44 = vadd.xlane.f32.xlu0 %v43
    %v45 = vpop.xlane.xlu0 %44
    %v46 = vmul.f32 %v42, %v33
    %v47 = vmul.f32 %v45, %v33
    %v48 = vadd.f32 %v46, 1e-05
    %v49 = vadd.f32 %v47, 1e-05
    %v50 = vrsqrt.pop %v48
    %v51 = vmul.f32 %v50, %v48
    %v52 = vmul.f32 %v51, %v50
    %v53 = vmul.f32 0.5, %v52
    %v54 = vsub.f32 1.5, %v53
    %v55 = vmul.f32 %v50, %v54
    %vm56 = vweird.f32 %v48
    %vm57 = vweird.f32 %v50
    %vm58 = vmor %vm56, %vm57
    %v59 = vsel %vm58, %v50, %v55
    %v60 = vrsqrt.pop %v49
    %v61 = vmul.f32 %v60, %v49
    %v62 = vmul.f32 %v61, %v60
    %v63 = vmul.f32 0.5, %v62
    %v64 = vsub.f32 1.5, %v63
    %v65 = vmul.f32 %v60, %v64
    %vm66 = vweird.f32 %v49
    %vm67 = vweird.f32 %v60
    %vm68 = vmor %vm66, %vm67
    %v69 = vsel %vm68, %v60, %v65
    %v70 = vmul.f32 %v36, %v59
    %v71 = vmul.f32 %v37, %v69
    %v72 = vld [vmem:[%s1] sm:$0x1]
    %v74 = vperm.slane %v72, 0
    %v76 = vmul.f32 %v70, %v74
    %v77 = vmul.f32 %v71, %v74
    %v78 = vld [vmem:[%s2] sm:$0x1]
    %v80 = vperm.slane %v78, 0
    %v82 = vadd.f32 %v76, %v80
    %v83 = vadd.f32 %v77, %v80
    %v84 = vpack.c.bf16 %v83, %v82
    %v85 = vld [vmem:[%s3] sm:$0xf]
    %v86 = vld [vmem:[%s3 + $0x4] sm:$0xf]
    %v87 = vld [vmem:[%s3 + $0x8] sm:$0xf]
    %v88 = vld [vmem:[%s3 + $0xc] sm:$0xf]
    %v89 = vld [vmem:[%s3 + $0x10] sm:$0xf]
    %v90 = vld [vmem:[%s3 + $0x14] sm:$0xf]
    %v91 = vld [vmem:[%s3 + $0x18] sm:$0xf]
    %v92 = vld [vmem:[%s3 + $0x1c] sm:$0xf]
    %v93 = vld [vmem:[%s3 + $0x20] sm:$0xf]
    %v94 = vld [vmem:[%s3 + $0x24] sm:$0xf]
    %v95 = vld [vmem:[%s3 + $0x28] sm:$0xf]
    %v96 = vld [vmem:[%s3 + $0x2c] sm:$0xf]
    %v97 = vld [vmem:[%s3 + $0x30] sm:$0xf]
    %v98 = vld [vmem:[%s3 + $0x34] sm:$0xf]
    %v99 = vld [vmem:[%s3 + $0x38] sm:$0xf]
    %v100 = vld [vmem:[%s3 + $0x3c] sm:$0xf]
    %v101 = vld [vmem:[%s3 + $0x40] sm:$0xf]
    %v102 = vld [vmem:[%s3 + $0x44] sm:$0xf]
    %v103 = vld [vmem:[%s3 + $0x48] sm:$0xf]
    %v104 = vld [vmem:[%s3 + $0x4c] sm:$0xf]
    %v105 = vld [vmem:[%s3 + $0x50] sm:$0xf]
    %v106 = vld [vmem:[%s3 + $0x54] sm:$0xf]
    %v107 = vld [vmem:[%s3 + $0x58] sm:$0xf]
    %v108 = vld [vmem:[%s3 + $0x5c] sm:$0xf]
    %v109 = vld [vmem:[%s3 + $0x60] sm:$0xf]
    %v110 = vld [vmem:[%s3 + $0x64] sm:$0xf]
    %v111 = vld [vmem:[%s3 + $0x68] sm:$0xf]
    %v112 = vld [vmem:[%s3 + $0x6c] sm:$0xf]
    %v113 = vld [vmem:[%s3 + $0x70] sm:$0xf]
    %v114 = vld [vmem:[%s3 + $0x74] sm:$0xf]
    %v115 = vld [vmem:[%s3 + $0x78] sm:$0xf]
    %v116 = vld [vmem:[%s3 + $0x7c] sm:$0xf]
    %v149 = vunpack.c.l.b16 %v85
    %v150 = vunpack.c.l.b16 %v86
    %v151 = vunpack.c.l.b16 %v87
    %v152 = vunpack.c.l.b16 %v88
    %v153 = vunpack.c.l.b16 %v89
    %v154 = vunpack.c.l.b16 %v90
    %v155 = vunpack.c.l.b16 %v91
    %v156 = vunpack.c.l.b16 %v92
    %v157 = vunpack.c.l.b16 %v93
    %v158 = vunpack.c.l.b16 %v94
    %v159 = vunpack.c.l.b16 %v95
    %v160 = vunpack.c.l.b16 %v96
    %v161 = vunpack.c.l.b16 %v97
    %v162 = vunpack.c.l.b16 %v98
    %v163 = vunpack.c.l.b16 %v99
    %v164 = vunpack.c.l.b16 %v100
    %v165 = vunpack.c.l.b16 %v101
    %v166 = vunpack.c.l.b16 %v102
    %v167 = vunpack.c.l.b16 %v103
    %v168 = vunpack.c.l.b16 %v104
    %v169 = vunpack.c.l.b16 %v105
    %v170 = vunpack.c.l.b16 %v106
    %v171 = vunpack.c.l.b16 %v107
    %v172 = vunpack.c.l.b16 %v108
    %v173 = vunpack.c.l.b16 %v109
    %v174 = vunpack.c.l.b16 %v110
    %v175 = vunpack.c.l.b16 %v111
    %v176 = vunpack.c.l.b16 %v112
    %v177 = vunpack.c.l.b16 %v113
    %v178 = vunpack.c.l.b16 %v114
    %v179 = vunpack.c.l.b16 %v115
    %v180 = vunpack.c.l.b16 %v116
    %v181 = vpack.c.b16 %v150, %v149
    %v182 = vpack.c.b16 %v152, %v151
    %v183 = vpack.c.b16 %v154, %v153
    %v184 = vpack.c.b16 %v156, %v155
    %v185 = vpack.c.b16 %v158, %v157
    %v186 = vpack.c.b16 %v160, %v159
    %v187 = vpack.c.b16 %v162, %v161
    %v188 = vpack.c.b16 %v164, %v163
    %v189 = vpack.c.b16 %v166, %v165
    %v190 = vpack.c.b16 %v168, %v167
    %v191 = vpack.c.b16 %v170, %v169
    %v192 = vpack.c.b16 %v172, %v171
    %v193 = vpack.c.b16 %v174, %v173
    %v194 = vpack.c.b16 %v176, %v175
    %v195 = vpack.c.b16 %v178, %v177
    %v196 = vpack.c.b16 %v180, %v179
    %v198 = vsel %vm20, %v84, 0
    %v201 = vsel %vm20, %v181, 0
    %v204 = vsel %vm20, %v182, 0
    %v207 = vsel %vm20, %v183, 0
    %v210 = vsel %vm20, %v184, 0
    %v213 = vsel %vm20, %v185, 0
    %v216 = vsel %vm20, %v186, 0
    %v219 = vsel %vm20, %v187, 0
    %v222 = vsel %vm20, %v188, 0
    %v225 = vsel %vm20, %v189, 0
    %v228 = vsel %vm20, %v190, 0
    %v231 = vsel %vm20, %v191, 0
    %v234 = vsel %vm20, %v192, 0
    %v237 = vsel %vm20, %v193, 0
    %v240 = vsel %vm20, %v194, 0
    %v243 = vsel %vm20, %v195, 0
    %v246 = vsel %vm20, %v196, 0
    %248 = vmatpush.bf16.xpose.msra.mxu0 %v222
    %249 = vmatpush.bf16.xpose.msra.mxu0 %v219
    %250 = vmatpush.bf16.xpose.msra.mxu0 %v216
    %251 = vmatpush.bf16.xpose.msra.mxu0 %v213
    %252 = vmatpush.bf16.xpose.msra.mxu0 %v210
    %253 = vmatpush.bf16.xpose.msra.mxu0 %v207
    %254 = vmatpush.bf16.xpose.msra.mxu0 %v204
    %255 = vmatpush.bf16.xpose.msra.mxu0 %v201
    %256 = vmatmul.bf16.gmra.mxu0 %v198
    %v257 = vpop.f32.mrf.mxu0
    %v258 = vadd.f32 0.0, %v257
    %v259 = vpop.f32.mrf.mxu0
    %v260 = vadd.f32 0.0, %v259
    %261 = vdwg.mxu0
    %262 = vmatpush.bf16.xpose.msra.mxu0 %v246
    %263 = vmatpush.bf16.xpose.msra.mxu0 %v243
    %264 = vmatpush.bf16.xpose.msra.mxu0 %v240
    %265 = vmatpush.bf16.xpose.msra.mxu0 %v237
    %266 = vmatpush.bf16.xpose.msra.mxu0 %v234
    %267 = vmatpush.bf16.xpose.msra.mxu0 %v231
    %268 = vmatpush.bf16.xpose.msra.mxu0 %v228
    %269 = vmatpush.bf16.xpose.msra.mxu0 %v225
    %270 = vmatmul.bf16.gmra.mxu0 %v198
    %v271 = vpop.f32.mrf.mxu0
    %v272 = vadd.f32 0.0, %v271
    %v273 = vpop.f32.mrf.mxu0
    %v274 = vadd.f32 0.0, %v273
    %275 = vdwg.mxu0
    %276 = vst [vmem:[#allocation2] sm:$0xff] %v258
    %277 = vst [vmem:[#allocation2 + $0x8] sm:$0xff] %v272
    %278 = vst [vmem:[#allocation2 + $0x10] sm:$0xff] %v260
    %279 = vst [vmem:[#allocation2 + $0x18] sm:$0xff] %v274
    // Predicated region
    $region18: #{tpu_custom_call.1} parent=1 // pred_check
      _
    $region19: #{tpu_custom_call.1} parent=1 // pred_check_branch
      %281 = sbr.rel (0) target = $region21
    $region20: #{tpu_custom_call.1} parent=1 // pred_region
      %283 = vsyncadd [#allocation3], 0
      %s284 = sshll.u32 [#allocation2], 4
      %s285 = int_to_ptr.vmem [resolvable:$true] %s284
      %s286 = sshll.u32 %s4, 4
      %s287 = int_to_ptr.hbm [resolvable:$true] %s286
      %292 = dma.vmem_to_hbm [thread:$0]  %s285, 512, %s287, [#allocation3], 256, 256, 16
    $region21: #{tpu_custom_call.1} parent=1 // pred_fallthru
      _
    // Predicated region
    $region22: #{tpu_custom_call.1} parent=1 // pred_check
      _
    $region23: #{tpu_custom_call.1} parent=1 // pred_check_branch
      %294 = sbr.rel (0) target = $region25
    $region24: #{tpu_custom_call.1} parent=1 // pred_region
      %296 = dma.done [#allocation3], 512
    $region25: #{tpu_custom_call.1} parent=1 // pred_fallthru
      _
    %297 = vsyncpa [#allocation3], 1

</llo_original>
